<compile_context>
chip_gen: v5e
topology: v5e:2x2
jax: 0.10.0
libtpu: 0.0.40
codegen_flags: <defaults>
</compile_context>

<pallas_src>
import functools

import jax
import jax.numpy as jnp
from jax.experimental import pallas as pl
from jax.experimental.pallas import tpu as pltpu

num_user = 16
num_var = 4
D = num_user * num_var  # 64


def _leaky_relu(x, slope=0.2):
    return jnp.where(x > 0, x, slope * x)


def discriminator_kernel(nd_ref, d_ref, w_ref, w3_ref, b12_ref, b3_ref, o_ref):
    # Cast in-kernel (hidden under DMA) and fuse the two half-width matmuls
    # into one full-lane (tb,128) x (128,128) bf16 matmul, f32 accumulation.
    y = jnp.concatenate(
        [nd_ref[...].astype(jnp.bfloat16), d_ref[...].astype(jnp.bfloat16)],
        axis=-1,
    )                                                           # (tb, 2D) bf16
    h = jnp.dot(y, w_ref[...], preferred_element_type=jnp.float32)  # (tb, 2D) f32

    # cols [0:D]  = nd @ w1.T  (pre-bias x1), cols [D:2D] = d @ w2.T (pre-bias x2)
    act = _leaky_relu(h + b12_ref[...])                         # (tb, 2D) f32

    # l3(concat([x1, x2], 1)) == sum(act * w3_row) + b3
    # (one full-vreg multiply + one 128-lane XLU reduce; no concat, no N=1 matmul)
    logits = jnp.sum(act * w3_ref[...], axis=-1, keepdims=True) + b3_ref[...]  # (tb, 1)

    # Exact sigmoid: exp on EUP is not the bottleneck, and exact math keeps
    # outputs strictly inside [0, 1] (safe for BCE-style losses downstream).
    o_ref[...] = (1.0 / (1.0 + jnp.exp(-logits))).astype(o_ref.dtype)


def prepare_params(params):
    """One-time glue, outside the per-step forward.

    params are PyTorch-layout: w1/w2 (out,in)=(D,D), b1/b2 (D,),
    w3 (1, 2D), b3 (1,).
    """
    w1t = params["w1"].T.astype(jnp.float32)  # (D, D) in->out
    w2t = params["w2"].T.astype(jnp.float32)  # (D, D) in->out
    w = jnp.zeros((2 * D, 2 * D), jnp.float32)
    w = w.at[:D, :D].set(w1t).at[D:, D:].set(w2t)       # blockdiag(w1.T, w2.T)
    return {
        "w": w.astype(jnp.bfloat16),                                          # (2D, 2D) bf16
        "w3": params["w3"].reshape(1, 2 * D).astype(jnp.float32),             # (1, 2D), cat order
        "b12": jnp.concatenate([params["b1"], params["b2"]]).reshape(1, 2 * D).astype(jnp.float32),
        "b3": params["b3"].reshape(1, 1).astype(jnp.float32),                 # (1, 1)
    }


def discriminator_forward(nd, d, prepared, *, tb=None):
    """nd, d: [B, D] float32.  prepared: output of prepare_params."""
    B, feat = nd.shape
    assert feat == D and d.shape == (B, D)

    # Batch tile: multiple of 8 sublanes, capped at 4096 (safe in v5e's 16 MiB
    # scoped-VMEM default and v7x's 64 MiB).  For B > 1024 target half the
    # batch so there are >= 2 grid steps and the "parallel" axis can shard
    # across both v7x TensorCores.
    if tb is None:
        target = B if B <= 1024 else -(-B // 2)
        tb = min(4096, ((target + 7) // 8) * 8)
    else:
        tb = max(8, (tb // 8) * 8)
    n_tiles = pl.cdiv(B, tb)

    def full(r, c):
        return pl.BlockSpec((r, c), lambda i: (0, 0))

    cost = pl.CostEstimate(
        flops=2 * B * (2 * D) * (2 * D) + 6 * B * (2 * D),
        transcendentals=B,
        bytes_accessed=2 * B * D * 4            # nd, d (f32, read once)
        + B * 4                                  # output
        + (2 * D) * (2 * D) * 2                  # blockdiag weights (bf16)
        + (2 * (2 * D) + 1) * 4,                 # w3 + b12 + b3
    )

    out = pl.pallas_call(
        discriminator_kernel,
        out_shape=jax.ShapeDtypeStruct((B, 1), jnp.float32),
        grid_spec=pltpu.PrefetchScalarGridSpec(
            num_scalar_prefetch=0,
            grid=(n_tiles,),
            in_specs=[
                pl.BlockSpec((tb, D), lambda i: (i, 0)),  # nd tile (f32, cast in-kernel)
                pl.BlockSpec((tb, D), lambda i: (i, 0)),  # d tile (f32, cast in-kernel)
                full(2 * D, 2 * D),                        # blockdiag(w1.T, w2.T) bf16
                full(1, 2 * D),                            # w3 row (f32)
                full(1, 2 * D),                            # [b1 | b2] (f32)
                full(1, 1),                                # b3 (f32)
            ],
            out_specs=pl.BlockSpec((tb, 1), lambda i: (i, 0)),
        ),
        compiler_params=pltpu.CompilerParams(
            dimension_semantics=("parallel",),
        ),
        cost_estimate=cost,
    )(nd, d, prepared["w"], prepared["w3"], prepared["b12"], prepared["b3"])

    return out


def init_params(key):
    """PyTorch nn.Linear default init (uniform +-1/sqrt(fan_in)), PyTorch layout."""
    keys = jax.random.split(key, 6)
    bound_d = 1.0 / jnp.sqrt(jnp.float32(D))
    bound_2d = 1.0 / jnp.sqrt(jnp.float32(2 * D))

    def u(k, shape, bound):
        return jax.random.uniform(k, shape, jnp.float32, -bound, bound)

    return {
        "w1": u(keys[0], (D, D), bound_d), "b1": u(keys[1], (D,), bound_d),
        "w2": u(keys[2], (D, D), bound_d), "b2": u(keys[3], (D,), bound_d),
        "w3": u(keys[4], (1, 2 * D), bound_2d), "b3": u(keys[5], (1,), bound_2d),
    }


def reference_forward(nd, d, params):
    """Pure-JAX f32 reference of the PyTorch Discriminator forward."""
    x1 = nd @ params["w1"].T + params["b1"]
    x1 = jnp.where(x1 > 0, x1, 0.2 * x1)
    x2 = d @ params["w2"].T + params["b2"]
    x2 = jnp.where(x2 > 0, x2, 0.2 * x2)
    cat = jnp.concatenate([x1, x2], axis=1)
    return jax.nn.sigmoid(cat @ params["w3"].T + params["b3"])


if __name__ == "__main__":
    key = jax.random.PRNGKey(0)
    k_param, k_nd, k_d = jax.random.split(key, 3)

    params = init_params(k_param)
    prepared = prepare_params(params)

    B = 8
    nd = jax.random.normal(k_nd, (B, D), jnp.float32)
    d = jax.random.normal(k_d, (B, D), jnp.float32)

    fwd = jax.jit(functools.partial(discriminator_forward))
    out = jax.block_until_ready(fwd(nd, d, prepared))

    ref = reference_forward(nd, d, params)
    assert out.shape == (B, 1)
    # bf16 matmul operands -> loose-but-meaningful tolerance for sigmoid
    # outputs in [0, 1].
    assert jnp.allclose(out, ref, atol=2e-2), float(jnp.max(jnp.abs(out - ref)))

    print("KERNEL_OK")
</pallas_src>

<mosaic_0001>
module attributes {stable_mosaic.version = 11 : i64} {
  func.func @discriminator_kernel(%arg0: i32, %arg1: memref<8x64xf32, #tpu.memory_space<vmem>>, %arg2: memref<8x64xf32, #tpu.memory_space<vmem>>, %arg3: memref<128x128xbf16, #tpu.memory_space<vmem>>, %arg4: memref<1x128xf32, #tpu.memory_space<vmem>>, %arg5: memref<1x128xf32, #tpu.memory_space<vmem>>, %arg6: memref<1x1xf32, #tpu.memory_space<vmem>>, %arg7: memref<8x1xf32, #tpu.memory_space<vmem>>) attributes {dimension_semantics = [#tpu.dimension_semantics<parallel>], iteration_bounds = array<i64: 1>, scalar_prefetch = 0 : i64, scratch_operands = 0 : i64, tpu.core_type = #tpu.core_type<tc>, window_params = [{transform_indices = @transform_0, window_bounds = array<i64: 8, 64>}, {transform_indices = @transform_1, window_bounds = array<i64: 8, 64>}, {pipeline_mode = #tpu.pipeline_mode<synchronous>, transform_indices = @transform_2, window_bounds = array<i64: 128, 128>}, {pipeline_mode = #tpu.pipeline_mode<synchronous>, transform_indices = @transform_3, window_bounds = array<i64: 1, 128>}, {pipeline_mode = #tpu.pipeline_mode<synchronous>, transform_indices = @transform_4, window_bounds = array<i64: 1, 128>}, {pipeline_mode = #tpu.pipeline_mode<synchronous>, transform_indices = @transform_5, window_bounds = array<i64: 1, 1>}, {transform_indices = @transform_6, window_bounds = array<i64: 8, 1>}]} {
    %c0 = arith.constant 0 : index
    %c0_0 = arith.constant 0 : index
    %0 = vector.load %arg1[%c0, %c0_0] : memref<8x64xf32, #tpu.memory_space<vmem>>, vector<8x64xf32>
    %1 = arith.truncf %0 : vector<8x64xf32> to vector<8x64xbf16>
    %c0_1 = arith.constant 0 : index
    %c0_2 = arith.constant 0 : index
    %2 = vector.load %arg2[%c0_1, %c0_2] : memref<8x64xf32, #tpu.memory_space<vmem>>, vector<8x64xf32>
    %3 = arith.truncf %2 : vector<8x64xf32> to vector<8x64xbf16>
    %4 = tpu.concatenate %1, %3 in 1 : vector<8x64xbf16>, vector<8x64xbf16> -> vector<8x128xbf16>
    %c0_3 = arith.constant 0 : index
    %c0_4 = arith.constant 0 : index
    %5 = vector.load %arg3[%c0_3, %c0_4] : memref<128x128xbf16, #tpu.memory_space<vmem>>, vector<128x128xbf16>
    %cst = arith.constant dense<0.000000e+00> : vector<8x128xf32>
    %6 = tpu.matmul %4, %5, %cst {dimension_numbers = #tpu.dot_dimension_numbers<[1], [0], [0], [1], [0, 0, 1, 1], [], []>} : vector<8x128xbf16>, vector<128x128xbf16>, vector<8x128xf32> -> vector<8x128xf32>
    %c0_5 = arith.constant 0 : index
    %c0_6 = arith.constant 0 : index
    %7 = vector.load %arg5[%c0_5, %c0_6] : memref<1x128xf32, #tpu.memory_space<vmem>>, vector<1x128xf32>
    %8 = vector.broadcast %7 : vector<1x128xf32> to vector<8x128xf32>
    %9 = arith.addf %6, %8 : vector<8x128xf32>
    %cst_7 = arith.constant 0.000000e+00 : f32
    %10 = vector.broadcast %cst_7 : f32 to vector<8x128xf32>
    %11 = arith.cmpf ogt, %9, %10 : vector<8x128xf32>
    %cst_8 = arith.constant 2.000000e-01 : f32
    %12 = vector.broadcast %cst_8 : f32 to vector<8x128xf32>
    %13 = arith.mulf %12, %9 : vector<8x128xf32>
    %14 = arith.select %11, %9, %13 : vector<8x128xi1>, vector<8x128xf32>
    %c0_9 = arith.constant 0 : index
    %c0_10 = arith.constant 0 : index
    %15 = vector.load %arg4[%c0_9, %c0_10] : memref<1x128xf32, #tpu.memory_space<vmem>>, vector<1x128xf32>
    %16 = vector.broadcast %15 : vector<1x128xf32> to vector<8x128xf32>
    %17 = arith.mulf %14, %16 : vector<8x128xf32>
    %cst_11 = arith.constant dense<0.000000e+00> : vector<8xf32>
    %18 = vector.multi_reduction <add>, %17, %cst_11 [1] : vector<8x128xf32> to vector<8xf32>
    %19 = vector.shape_cast %18 : vector<8xf32> to vector<8x1xf32>
    %c0_12 = arith.constant 0 : index
    %c0_13 = arith.constant 0 : index
    %20 = vector.load %arg6[%c0_12, %c0_13] : memref<1x1xf32, #tpu.memory_space<vmem>>, vector<1x1xf32>
    %21 = vector.broadcast %20 : vector<1x1xf32> to vector<8x1xf32>
    %22 = arith.addf %19, %21 : vector<8x1xf32>
    %cst_14 = arith.constant 0.000000e+00 : f32
    %23 = vector.broadcast %cst_14 : f32 to vector<8x1xf32>
    %24 = arith.subf %23, %22 : vector<8x1xf32>
    %25 = math.exp %24 : vector<8x1xf32>
    %cst_15 = arith.constant 1.000000e+00 : f32
    %26 = vector.broadcast %cst_15 : f32 to vector<8x1xf32>
    %27 = arith.addf %26, %25 : vector<8x1xf32>
    %cst_16 = arith.constant 1.000000e+00 : f32
    %28 = vector.broadcast %cst_16 : f32 to vector<8x1xf32>
    %29 = arith.divf %28, %27 : vector<8x1xf32>
    %c0_17 = arith.constant 0 : index
    %c0_18 = arith.constant 0 : index
    %30 = vector.load %arg7[%c0_17, %c0_18] : memref<8x1xf32, #tpu.memory_space<vmem>>, vector<8x1xf32>
    tpu.vector_store %arg7[%c0_17, %c0_18], %29 {strides = array<i32>} : memref<8x1xf32, #tpu.memory_space<vmem>>, vector<8x1xf32>,
    return
  }
  func.func @transform_0(%arg0: i32) -> (i32, i32) {
    %c0_i32 = arith.constant 0 : i32
    %c0_i32_0 = arith.constant 0 : i32
    return %arg0, %c0_i32 : i32, i32
  }
  func.func @transform_1(%arg0: i32) -> (i32, i32) {
    %c0_i32 = arith.constant 0 : i32
    %c0_i32_0 = arith.constant 0 : i32
    return %arg0, %c0_i32 : i32, i32
  }
  func.func @transform_2(%arg0: i32) -> (i32, i32) {
    %c0_i32 = arith.constant 0 : i32
    %c0_i32_0 = arith.constant 0 : i32
    %c0_i32_1 = arith.constant 0 : i32
    return %c0_i32, %c0_i32_0 : i32, i32
  }
  func.func @transform_3(%arg0: i32) -> (i32, i32) {
    %c0_i32 = arith.constant 0 : i32
    %c0_i32_0 = arith.constant 0 : i32
    %c0_i32_1 = arith.constant 0 : i32
    return %c0_i32, %c0_i32_0 : i32, i32
  }
  func.func @transform_4(%arg0: i32) -> (i32, i32) {
    %c0_i32 = arith.constant 0 : i32
    %c0_i32_0 = arith.constant 0 : i32
    %c0_i32_1 = arith.constant 0 : i32
    return %c0_i32, %c0_i32_0 : i32, i32
  }
  func.func @transform_5(%arg0: i32) -> (i32, i32) {
    %c0_i32 = arith.constant 0 : i32
    %c0_i32_0 = arith.constant 0 : i32
    %c0_i32_1 = arith.constant 0 : i32
    return %c0_i32, %c0_i32_0 : i32, i32
  }
  func.func @transform_6(%arg0: i32) -> (i32, i32) {
    %c0_i32 = arith.constant 0 : i32
    %c0_i32_0 = arith.constant 0 : i32
    return %arg0, %c0_i32 : i32, i32
  }
}

</mosaic_0001>

<llo_original>
// kernel: discriminator_forward.1
$region0: #{discriminator_forward.1}
  #allocation0 [shape = 'u32[]', space=smem, size = 0x4, offset = 0x4, fixed_abs, tag = 'smem constant byte address 0x4 - core index']
  #allocation1 [shape = 'u32[72,128]{1,0:T(1,128)}', space=vmem, size = 0x9000, scoped, tag = 'internal scratch']
  #allocation2 [shape = 'f32[1,1]{1,0:T(1,128)S(1)}', space=vmem, size = 0x200, scoped, tag = 'scoped memory for discriminator_forward.1']
  %s0 = inlined_call_operand.hbm [shape: f32[8,64], index: 0, kind: input, shape index: {}]
  %s1 = inlined_call_operand.hbm [shape: f32[8,64], index: 1, kind: input, shape index: {}]
  %s2 = inlined_call_operand.hbm [shape: bf16[128,128], index: 2, kind: input, shape index: {}]
  %s3 = inlined_call_operand.vmem [shape: f32[1,128], index: 3, kind: input, shape index: {}]
  %s4 = inlined_call_operand.vmem [shape: f32[1,128], index: 4, kind: input, shape index: {}]
  %s5 = inlined_call_operand.<no memory space> [shape: f32[1,1], index: 5, kind: input, shape index: {}]
  %s6 = inlined_call_operand.vmem [shape: f32[8,1], index: 6, kind: output, shape index: {}]
  %s7 = sld [smem:[#allocation0]]
  $region46: #{discriminator_forward.1} parent=0
    _
  %s9 = ssub.s32 1, %s7
  %s10 = scalar_select 0, %s9, %s7
  %v11 = vstv %s5
  %12 = vst [vmem:[#allocation2] sm:$0x1] %v11
  $region1: #{discriminator_forward.1} parent=0
    #allocation3 [shape = 'u8[4096]{0}', space=vmem, size = 0x1000, scoped, tag = 'input window, operand 0, single buffered']
    #allocation4 [shape = 's32[1]{0}', space=sflag, size = 0x4, scoped, tag = 'scoped memory for discriminator_forward.1']
    #allocation5 [shape = 'u8[4096]{0}', space=vmem, size = 0x1000, scoped, tag = 'input window, operand 1, single buffered']
    #allocation6 [shape = 's32[1]{0}', space=sflag, size = 0x4, scoped, tag = 'scoped memory for discriminator_forward.1']
    #allocation7 [shape = 'u8[32768]{0}', space=vmem, size = 0x8000, scoped, tag = 'input window, operand 2, single buffered']
    %13 = vsyncpa [#allocation4], 0
    %14 = vsyncpa [#allocation6], 0
    // Predicated region
    $region2: #{discriminator_forward.1} parent=1 // pred_check
      _
    $region3: #{discriminator_forward.1} parent=1 // pred_check_branch
      %16 = sbr.rel (0) target = $region5
    $region4: #{discriminator_forward.1} parent=1 // pred_region
      %18 = vsyncadd [#allocation4], 0
      %s20 = sshll.u32 %s0, 4
      %s21 = int_to_ptr.hbm [resolvable:$true] %s20
      %s22 = sshll.u32 [#allocation3], 4
      %s23 = int_to_ptr.vmem [resolvable:$true] %s22
      %25 = dma.hbm_to_vmem [thread:$0]  %s21, 128, %s23, [#allocation4]
    $region5: #{discriminator_forward.1} parent=1 // pred_fallthru
      _
    // Predicated region
    $region6: #{discriminator_forward.1} parent=1 // pred_check
      _
    $region7: #{discriminator_forward.1} parent=1 // pred_check_branch
      %27 = sbr.rel (0) target = $region9
    $region8: #{discriminator_forward.1} parent=1 // pred_region
      %29 = vsyncadd [#allocation6], 0
      %s31 = sshll.u32 %s1, 4
      %s32 = int_to_ptr.hbm [resolvable:$true] %s31
      %s33 = sshll.u32 [#allocation5], 4
      %s34 = int_to_ptr.vmem [resolvable:$true] %s33
      %36 = dma.hbm_to_vmem [thread:$0]  %s32, 128, %s34, [#allocation6]
    $region9: #{discriminator_forward.1} parent=1 // pred_fallthru
      _
    // Predicated region
    $region10: #{discriminator_forward.1} parent=1 // pred_check
      _
    $region11: #{discriminator_forward.1} parent=1 // pred_check_branch
      %38 = sbr.rel (0) target = $region13
    $region12: #{discriminator_forward.1} parent=1 // pred_region
      %40 = vsyncadd [#allocation6], 0
      %s41 = sshll.u32 %s2, 4
      %s42 = int_to_ptr.hbm [resolvable:$true] %s41
      %s43 = sshll.u32 [#allocation7], 4
      %s44 = int_to_ptr.vmem [resolvable:$true] %s43
      %49 = dma.hbm_to_vmem [thread:$0]  %s42, 1024, %s44, [#allocation6], 64, 64, 4
    $region13: #{discriminator_forward.1} parent=1 // pred_fallthru
      _
    // Predicated region
    $region14: #{discriminator_forward.1} parent=1 // pred_check
      _
    $region15: #{discriminator_forward.1} parent=1 // pred_check_branch
      %51 = sbr.rel (0) target = $region17
    $region16: #{discriminator_forward.1} parent=1 // pred_region
      _
    $region17: #{discriminator_forward.1} parent=1 // pred_fallthru
      _
    // Predicated region
    $region18: #{discriminator_forward.1} parent=1 // pred_check
      _
    $region19: #{discriminator_forward.1} parent=1 // pred_check_branch
      %53 = sbr.rel (0) target = $region21
    $region20: #{discriminator_forward.1} parent=1 // pred_region
      _
    $region21: #{discriminator_forward.1} parent=1 // pred_fallthru
      _
    // Predicated region
    $region22: #{discriminator_forward.1} parent=1 // pred_check
      _
    $region23: #{discriminator_forward.1} parent=1 // pred_check_branch
      %55 = sbr.rel (0) target = $region25
    $region24: #{discriminator_forward.1} parent=1 // pred_region
      _
    $region25: #{discriminator_forward.1} parent=1 // pred_fallthru
      _
    // Predicated region
    $region26: #{discriminator_forward.1} parent=1 // pred_check
      _
    $region27: #{discriminator_forward.1} parent=1 // pred_check_branch
      %57 = sbr.rel (0) target = $region29
    $region28: #{discriminator_forward.1} parent=1 // pred_region
      %59 = dma.done [#allocation4], 128
    $region29: #{discriminator_forward.1} parent=1 // pred_fallthru
      _
    // Predicated region
    $region30: #{discriminator_forward.1} parent=1 // pred_check
      _
    $region31: #{discriminator_forward.1} parent=1 // pred_check_branch
      %61 = sbr.rel (0) target = $region33
    $region32: #{discriminator_forward.1} parent=1 // pred_region
      %63 = dma.done [#allocation6], 128
    $region33: #{discriminator_forward.1} parent=1 // pred_fallthru
      _
    // Predicated region
    $region34: #{discriminator_forward.1} parent=1 // pred_check
      _
    $region35: #{discriminator_forward.1} parent=1 // pred_check_branch
      %65 = sbr.rel (0) target = $region37
    $region36: #{discriminator_forward.1} parent=1 // pred_region
      %67 = dma.done [#allocation6], 1024
    $region37: #{discriminator_forward.1} parent=1 // pred_fallthru
      _
    %v68 = vld [vmem:[#allocation3] sm:$0xff]
    %v69 = vpack.c.bf16 %v68, %v68
    %v70 = vld [vmem:[#allocation5] sm:$0xff]
    %v71 = vpack.c.bf16 %v70, %v70
    %v73 = vunpack.c.l.b16 %v71
    %v74 = vpack.c.b16 %v73, %v73
    %75 = vrot.lane.b32.xlu0 %v74, 64
    %v76 = vpop.permute.xlu0 %75
    %vm77 = vcmask 523264
    %v80 = vsel %vm77, %v69, %v76
    %v82 = vld [vmem:[#allocation7] sm:$0xf]
    %v83 = vld [vmem:[#allocation7 + $0x4] sm:$0xf]
    %v84 = vld [vmem:[#allocation7 + $0x8] sm:$0xf]
    %v85 = vld [vmem:[#allocation7 + $0xc] sm:$0xf]
    %v86 = vld [vmem:[#allocation7 + $0x10] sm:$0xf]
    %v87 = vld [vmem:[#allocation7 + $0x14] sm:$0xf]
    %v88 = vld [vmem:[#allocation7 + $0x18] sm:$0xf]
    %v89 = vld [vmem:[#allocation7 + $0x1c] sm:$0xf]
    %v90 = vld [vmem:[#allocation7 + $0x20] sm:$0xf]
    %v91 = vld [vmem:[#allocation7 + $0x24] sm:$0xf]
    %v92 = vld [vmem:[#allocation7 + $0x28] sm:$0xf]
    %v93 = vld [vmem:[#allocation7 + $0x2c] sm:$0xf]
    %v94 = vld [vmem:[#allocation7 + $0x30] sm:$0xf]
    %v95 = vld [vmem:[#allocation7 + $0x34] sm:$0xf]
    %v96 = vld [vmem:[#allocation7 + $0x38] sm:$0xf]
    %v97 = vld [vmem:[#allocation7 + $0x3c] sm:$0xf]
    %v98 = vld [vmem:[%s4] sm:$0x1]
    %v100 = vperm.slane %v98, 0
    %v118 = vunpack.c.l.b16 %v82
    %v119 = vunpack.c.l.b16 %v83
    %v120 = vunpack.c.l.b16 %v84
    %v121 = vunpack.c.l.b16 %v85
    %v122 = vunpack.c.l.b16 %v86
    %v123 = vunpack.c.l.b16 %v87
    %v124 = vunpack.c.l.b16 %v88
    %v125 = vunpack.c.l.b16 %v89
    %v126 = vunpack.c.l.b16 %v90
    %v127 = vunpack.c.l.b16 %v91
    %v128 = vunpack.c.l.b16 %v92
    %v129 = vunpack.c.l.b16 %v93
    %v130 = vunpack.c.l.b16 %v94
    %v131 = vunpack.c.l.b16 %v95
    %v132 = vunpack.c.l.b16 %v96
    %v133 = vunpack.c.l.b16 %v97
    %v134 = vpack.c.b16 %v119, %v118
    %v135 = vpack.c.b16 %v121, %v120
    %v136 = vpack.c.b16 %v123, %v122
    %v137 = vpack.c.b16 %v125, %v124
    %v138 = vpack.c.b16 %v127, %v126
    %v139 = vpack.c.b16 %v129, %v128
    %v140 = vpack.c.b16 %v131, %v130
    %v141 = vpack.c.b16 %v133, %v132
    %150 = vmatpush.bf16.msra.mxu0 %v141
    %151 = vmatpush.bf16.msra.mxu0 %v140
    %152 = vmatpush.bf16.msra.mxu0 %v139
    %153 = vmatpush.bf16.msra.mxu0 %v138
    %154 = vmatpush.bf16.msra.mxu0 %v137
    %155 = vmatpush.bf16.msra.mxu0 %v136
    %156 = vmatpush.bf16.msra.mxu0 %v135
    %157 = vmatpush.bf16.msra.mxu0 %v134
    %158 = vmatmul.bf16.gmra.mxu0 %v80
    %v159 = vpop.f32.mrf.mxu0
    %v160 = vadd.f32 %v100, %v159
    %v161 = vpop.f32.mrf.mxu0
    %162 = vdwg.mxu0
    %vm163 = vcmp.gt.f32.partialorder %v160, 0.0
    %v164 = vmul.f32 %v160, 0.2
    %v165 = vsel %vm163, %v160, %v164
    %v166 = vld [vmem:[%s3] sm:$0x1]
    %v168 = vperm.slane %v166, 0
    %v170 = vmul.f32 %v165, %v168
    %171 = vadd.xlane.f32.xlu0 %v170
    %v172 = vpop.xlane.xlu0 %171
    %v173 = vld [vmem:[#allocation2] sm:$0x1]
    %v175 = vperm.slane %v173, 0
    %v177 = vadd.f32 %v172, %v175
    %v178 = vsub.f32 0.0, %v177
    %v179 = vmul.f32 %v178, 1.442695
    %v180 = vpow.pop %v179
    %v181 = vadd.f32 %v180, 1.0
    %v182 = vrcp.pop %v181
    %v183 = vmul.f32 %v181, %v182
    %v184 = vsub.f32 1.0, %v183
    %v185 = vmul.f32 %v182, %v184
    %v186 = vadd.f32 %v182, %v185
    %vm187 = vweird.f32 %v181
    %vm188 = vweird.f32 %v182
    %vm189 = vmor %vm187, %vm188
    %v190 = vsel %vm189, %v182, %v186
    %v191 = vand.u32 2147483647, %v181
    %vm192 = vcmp.eq.f32.partialorder %v191, 8.507059e+37
    %v193 = vand.u32 %v181, 2147483648
    %v194 = vor.u32 1.1754944e-38, %v193
    %v195 = vsel %vm192, %v194, %v190
    %v196 = vmul.f32 1.0, %v195
    %vm197 = vcmask 7168
    %198 = vst.msk [vmem:[%s6] sm:$0xff] %vm197, %v196
    // Predicated region
    $region38: #{discriminator_forward.1} parent=1 // pred_check
      _
    $region39: #{discriminator_forward.1} parent=1 // pred_check_branch
      %200 = sbr.rel (0) target = $region41
    $region40: #{discriminator_forward.1} parent=1 // pred_region
      _
    $region41: #{discriminator_forward.1} parent=1 // pred_fallthru
      _
    // Predicated region
    $region42: #{discriminator_forward.1} parent=1 // pred_check
      _
    $region43: #{discriminator_forward.1} parent=1 // pred_check_branch
      %202 = sbr.rel (0) target = $region45
    $region44: #{discriminator_forward.1} parent=1 // pred_region
      _
    $region45: #{discriminator_forward.1} parent=1 // pred_fallthru
      _
    %203 = vsyncpa [#allocation4], 1
    %204 = vsyncpa [#allocation6], 1

</llo_original>
